<compile_context>
chip_gen: v5e
topology: v5e:2x2
jax: 0.10.0
libtpu: 0.0.40
codegen_flags: <defaults>
</compile_context>

<pallas_src>
import functools

import jax
import jax.numpy as jnp
from jax.experimental import pallas as pl
from jax.experimental.pallas import tpu as pltpu

_PAIRWISE_EPS = 1e-6  # torch F.pairwise_distance default eps


def _round_up(x, m):
    return ((x + m - 1) // m) * m


def _contrastive_loss_kernel(out1_ref, out2_ref, label_ref, rowloss_ref, *, margin):
    # Elementwise diff + eps (matches torch: norm of (x1 - x2 + eps))
    diff = out1_ref[...].astype(jnp.float32) - out2_ref[...].astype(jnp.float32) + _PAIRWISE_EPS
    dsq = jnp.sum(diff * diff, axis=-1, keepdims=True)          # (tile_n, 1) == Dw^2
    dw = jnp.sqrt(dsq)                                          # (tile_n, 1) == pairwise_distance
    lbl = label_ref[...].astype(jnp.float32)                    # (tile_n, 1)

    pos = lbl * dsq                                             # label * Dw^2 (avoid square(sqrt))
    neg = (1.0 - lbl) * jnp.square(jnp.maximum(margin - dw, 0.0))
    # Per-row loss.  For the ragged last block, out-of-bounds rows are computed
    # on unspecified padded data but are discarded on writeback, so no mask is
    # needed (ops are purely row-local).
    rowloss_ref[...] = pos + neg


def contrastive_loss(out1, out2, label, margin=1.0, tile_n=None):
    """out1, out2: (N, D); label: (N,) or (N, 1) -> scalar f32 loss."""
    n, d = out1.shape
    assert out2.shape == (n, d)

    # Generation-aware VMEM budget (v5e/v6e: 128 MiB -> ~4 MiB/buffer;
    # v7x: 64 MiB/TC -> ~2 MiB/buffer).
    try:
        vmem_cap = int(pltpu.get_tpu_info().vmem_capacity_bytes)
    except Exception:  # pragma: no cover - conservative fallback
        vmem_cap = 64 * 1024 * 1024

    in_itemsize = jnp.dtype(out1.dtype).itemsize  # DMA happens in the input dtype
    if tile_n is None:
        budget_bytes = max(512 * 1024, vmem_cap // 32)   # per double-buffered input slot
        bytes_per_row = max(d, 1) * in_itemsize
        tile_n = max(8, (budget_bytes // bytes_per_row) // 8 * 8)
    tile_n = max(8, (int(tile_n) // 8) * 8)
    tile_n = min(tile_n, _round_up(n, 8))

    label2d = label.reshape(n, 1).astype(jnp.float32)

    grid = (pl.cdiv(n, tile_n),)   # ragged last block allowed; no jnp.pad of inputs
    vmem_limit = min(vmem_cap // 2, 64 * 1024 * 1024)

    kernel = functools.partial(_contrastive_loss_kernel, margin=float(margin))

    row_loss = pl.pallas_call(
        kernel,
        out_shape=jax.ShapeDtypeStruct((n, 1), jnp.float32),
        grid=grid,
        in_specs=[
            pl.BlockSpec((tile_n, d), lambda i: (i, 0)),
            pl.BlockSpec((tile_n, d), lambda i: (i, 0)),
            pl.BlockSpec((tile_n, 1), lambda i: (i, 0)),
        ],
        out_specs=pl.BlockSpec((tile_n, 1), lambda i: (i, 0)),
        compiler_params=pltpu.CompilerParams(
            dimension_semantics=("parallel",),   # independent blocks: dual-TC safe on v7x
            vmem_limit_bytes=vmem_limit,
        ),
    )(out1, out2, label2d)

    # Final reduction over a tiny (N, 1) f32 vector in the wrapper.
    return jnp.mean(row_loss)


def _reference_loss(out1, out2, label, margin=1.0):
    diff = out1.astype(jnp.float32) - out2.astype(jnp.float32) + _PAIRWISE_EPS
    dw = jnp.sqrt(jnp.sum(diff * diff, axis=-1))
    lbl = label.reshape(-1).astype(jnp.float32)
    return jnp.mean(lbl * dw**2 + (1.0 - lbl) * jnp.maximum(margin - dw, 0.0) ** 2)


if __name__ == "__main__":
    key = jax.random.PRNGKey(0)
    k1, k2, k3 = jax.random.split(key, 3)

    # Small shapes consistent with (batch, embedding_dim) inputs.
    N, D = 8, 32
    out1 = jax.random.normal(k1, (N, D), dtype=jnp.float32)
    out2 = jax.random.normal(k2, (N, D), dtype=jnp.float32)
    label = jax.random.bernoulli(k3, 0.5, (N,)).astype(jnp.float32)

    loss = jax.block_until_ready(contrastive_loss(out1, out2, label, margin=1.0))
    ref = _reference_loss(out1, out2, label, margin=1.0)
    assert jnp.allclose(loss, ref, rtol=1e-5, atol=1e-5), (loss, ref)

    # Multi-tile grid + ragged last block (no input padding; OOB rows discarded).
    k4, k5, k6 = jax.random.split(jax.random.PRNGKey(1), 3)
    N2, D2 = 20, 32
    a = jax.random.normal(k4, (N2, D2), dtype=jnp.float32)
    b = jax.random.normal(k5, (N2, D2), dtype=jnp.float32)
    lbl2 = jax.random.bernoulli(k6, 0.5, (N2,)).astype(jnp.float32)
    loss2 = jax.block_until_ready(contrastive_loss(a, b, lbl2, margin=1.0, tile_n=8))
    ref2 = _reference_loss(a, b, lbl2, margin=1.0)
    assert jnp.allclose(loss2, ref2, rtol=1e-5, atol=1e-5), (loss2, ref2)

    # bf16 inputs (half HBM bytes; kernel upcasts to f32 in vregs).
    k7, k8, k9 = jax.random.split(jax.random.PRNGKey(2), 3)
    N3, D3 = 24, 32
    c = jax.random.normal(k7, (N3, D3), dtype=jnp.bfloat16)
    dd = jax.random.normal(k8, (N3, D3), dtype=jnp.bfloat16)
    lbl3 = jax.random.bernoulli(k9, 0.5, (N3,)).astype(jnp.float32)
    loss3 = jax.block_until_ready(contrastive_loss(c, dd, lbl3, margin=1.0, tile_n=16))
    ref3 = _reference_loss(c, dd, lbl3, margin=1.0)
    assert jnp.allclose(loss3, ref3, rtol=1e-4, atol=1e-4), (loss3, ref3)

    print("KERNEL_OK")
</pallas_src>

<mosaic_0001>
module attributes {stable_mosaic.version = 11 : i64} {
  func.func @_contrastive_loss_kernel(%arg0: i32, %arg1: memref<8x32xf32, #tpu.memory_space<vmem>>, %arg2: memref<8x32xf32, #tpu.memory_space<vmem>>, %arg3: memref<8x1xf32, #tpu.memory_space<vmem>>, %arg4: memref<8x1xf32, #tpu.memory_space<vmem>>) attributes {dimension_semantics = [#tpu.dimension_semantics<parallel>], iteration_bounds = array<i64: 1>, scalar_prefetch = 0 : i64, scratch_operands = 0 : i64, tpu.core_type = #tpu.core_type<tc>, window_params = [{transform_indices = @transform_0, window_bounds = array<i64: 8, 32>}, {transform_indices = @transform_1, window_bounds = array<i64: 8, 32>}, {transform_indices = @transform_2, window_bounds = array<i64: 8, 1>}, {transform_indices = @transform_3, window_bounds = array<i64: 8, 1>}]} {
    %c0 = arith.constant 0 : index
    %c0_0 = arith.constant 0 : index
    %0 = vector.load %arg1[%c0, %c0_0] : memref<8x32xf32, #tpu.memory_space<vmem>>, vector<8x32xf32>
    %c0_1 = arith.constant 0 : index
    %c0_2 = arith.constant 0 : index
    %1 = vector.load %arg2[%c0_1, %c0_2] : memref<8x32xf32, #tpu.memory_space<vmem>>, vector<8x32xf32>
    %2 = arith.subf %0, %1 : vector<8x32xf32>
    %cst = arith.constant 9.99999997E-7 : f32
    %3 = vector.broadcast %cst : f32 to vector<8x32xf32>
    %4 = arith.addf %2, %3 : vector<8x32xf32>
    %5 = arith.mulf %4, %4 : vector<8x32xf32>
    %cst_3 = arith.constant dense<0.000000e+00> : vector<8xf32>
    %6 = vector.multi_reduction <add>, %5, %cst_3 [1] : vector<8x32xf32> to vector<8xf32>
    %7 = vector.shape_cast %6 : vector<8xf32> to vector<8x1xf32>
    %8 = math.sqrt %7 : vector<8x1xf32>
    %c0_4 = arith.constant 0 : index
    %c0_5 = arith.constant 0 : index
    %9 = vector.load %arg3[%c0_4, %c0_5] : memref<8x1xf32, #tpu.memory_space<vmem>>, vector<8x1xf32>
    %10 = arith.mulf %9, %7 : vector<8x1xf32>
    %cst_6 = arith.constant 1.000000e+00 : f32
    %11 = vector.broadcast %cst_6 : f32 to vector<8x1xf32>
    %12 = arith.subf %11, %9 : vector<8x1xf32>
    %cst_7 = arith.constant 1.000000e+00 : f32
    %13 = vector.broadcast %cst_7 : f32 to vector<8x1xf32>
    %14 = arith.subf %13, %8 : vector<8x1xf32>
    %cst_8 = arith.constant 0.000000e+00 : f32
    %15 = vector.broadcast %cst_8 : f32 to vector<8x1xf32>
    %16 = arith.maximumf %14, %15 : vector<8x1xf32>
    %17 = arith.mulf %16, %16 : vector<8x1xf32>
    %18 = arith.mulf %12, %17 : vector<8x1xf32>
    %19 = arith.addf %10, %18 : vector<8x1xf32>
    %c0_9 = arith.constant 0 : index
    %c0_10 = arith.constant 0 : index
    %20 = vector.load %arg4[%c0_9, %c0_10] : memref<8x1xf32, #tpu.memory_space<vmem>>, vector<8x1xf32>
    tpu.vector_store %arg4[%c0_9, %c0_10], %19 {strides = array<i32>} : memref<8x1xf32, #tpu.memory_space<vmem>>, vector<8x1xf32>,
    return
  }
  func.func @transform_0(%arg0: i32) -> (i32, i32) {
    %c0_i32 = arith.constant 0 : i32
    %c0_i32_0 = arith.constant 0 : i32
    return %arg0, %c0_i32 : i32, i32
  }
  func.func @transform_1(%arg0: i32) -> (i32, i32) {
    %c0_i32 = arith.constant 0 : i32
    %c0_i32_0 = arith.constant 0 : i32
    return %arg0, %c0_i32 : i32, i32
  }
  func.func @transform_2(%arg0: i32) -> (i32, i32) {
    %c0_i32 = arith.constant 0 : i32
    %c0_i32_0 = arith.constant 0 : i32
    return %arg0, %c0_i32 : i32, i32
  }
  func.func @transform_3(%arg0: i32) -> (i32, i32) {
    %c0_i32 = arith.constant 0 : i32
    %c0_i32_0 = arith.constant 0 : i32
    return %arg0, %c0_i32 : i32, i32
  }
}

</mosaic_0001>

<llo_original>
// kernel: tpu_custom_call.1
$region0: #{tpu_custom_call.1}
  #allocation0 [shape = 'u32[]', space=smem, size = 0x4, offset = 0x4, fixed_abs, tag = 'smem constant byte address 0x4 - core index']
  #allocation1 [shape = 'u32[72,128]{1,0:T(1,128)}', space=vmem, size = 0x9000, scoped, tag = 'internal scratch']
  %s0 = inlined_call_operand.vmem [shape: f32[8,32], index: 0, kind: input, shape index: {}]
  %s1 = inlined_call_operand.hbm [shape: f32[8,32], index: 1, kind: input, shape index: {}]
  %s2 = inlined_call_operand.vmem [shape: f32[8,1], index: 2, kind: input, shape index: {}]
  %s3 = inlined_call_operand.vmem [shape: f32[8,1], index: 3, kind: output, shape index: {}]
  %s4 = sld [smem:[#allocation0]]
  $region26: #{tpu_custom_call.1} parent=0
    _
  %s6 = ssub.s32 1, %s4
  %s7 = scalar_select 0, %s6, %s4
  $region1: #{tpu_custom_call.1} parent=0
    #allocation2 [shape = 'u8[4096]{0}', space=vmem, size = 0x1000, scoped, tag = 'input window, operand 1, single buffered']
    #allocation3 [shape = 's32[1]{0}', space=sflag, size = 0x4, scoped, tag = 'scoped memory for tpu_custom_call.1']
    %8 = vsyncpa [#allocation3], 0
    // Predicated region
    $region2: #{tpu_custom_call.1} parent=1 // pred_check
      _
    $region3: #{tpu_custom_call.1} parent=1 // pred_check_branch
      %10 = sbr.rel (0) target = $region5
    $region4: #{tpu_custom_call.1} parent=1 // pred_region
      _
    $region5: #{tpu_custom_call.1} parent=1 // pred_fallthru
      _
    // Predicated region
    $region6: #{tpu_custom_call.1} parent=1 // pred_check
      _
    $region7: #{tpu_custom_call.1} parent=1 // pred_check_branch
      %12 = sbr.rel (0) target = $region9
    $region8: #{tpu_custom_call.1} parent=1 // pred_region
      %14 = vsyncadd [#allocation3], 0
      %s16 = sshll.u32 %s1, 4
      %s17 = int_to_ptr.hbm [resolvable:$true] %s16
      %s18 = sshll.u32 [#allocation2], 4
      %s19 = int_to_ptr.vmem [resolvable:$true] %s18
      %21 = dma.hbm_to_vmem [thread:$0]  %s17, 128, %s19, [#allocation3]
    $region9: #{tpu_custom_call.1} parent=1 // pred_fallthru
      _
    // Predicated region
    $region10: #{tpu_custom_call.1} parent=1 // pred_check
      _
    $region11: #{tpu_custom_call.1} parent=1 // pred_check_branch
      %23 = sbr.rel (0) target = $region13
    $region12: #{tpu_custom_call.1} parent=1 // pred_region
      _
    $region13: #{tpu_custom_call.1} parent=1 // pred_fallthru
      _
    // Predicated region
    $region14: #{tpu_custom_call.1} parent=1 // pred_check
      _
    $region15: #{tpu_custom_call.1} parent=1 // pred_check_branch
      %25 = sbr.rel (0) target = $region17
    $region16: #{tpu_custom_call.1} parent=1 // pred_region
      %27 = dma.done [#allocation3], 128
    $region17: #{tpu_custom_call.1} parent=1 // pred_fallthru
      _
    %v28 = vld [vmem:[%s0] sm:$0xff]
    %v29 = vld [vmem:[#allocation2] sm:$0xff]
    %v30 = vsub.f32 %v28, %v29
    %v31 = vadd.f32 %v30, 1e-06
    %v32 = vmul.f32 %v31, %v31
    %vm33 = vcmask 261120
    %v34 = vsel %vm33, %v32, 0.0
    %35 = vadd.xlane.f32.xlu0 %v34
    %v36 = vpop.xlane.xlu0 %35
    %v37 = vrsqrt.pop %v36
    %v38 = vmul.f32 %v37, %v36
    %v39 = vmul.f32 %v38, %v37
    %v40 = vmul.f32 0.5, %v39
    %v41 = vsub.f32 1.5, %v40
    %v42 = vmul.f32 %v37, %v41
    %v43 = vmul.f32 %v36, %v42
    %vm44 = vcmp.eq.f32.partialorder %v36, inf
    %v45 = vsel %vm44, %v36, %v43
    %vm46 = vcmp.eq.f32.partialorder %v36, 0.0
    %v47 = vand.u32 %v36, 2147483648
    %v48 = vsel %vm46, %v47, %v45
    %v49 = vld [vmem:[%s2] sm:$0xff]
    %v50 = vmul.f32 %v49, %v36
    %v51 = vsub.f32 1.0, %v49
    %v52 = vsub.f32 1.0, %v48
    %v53 = vmax.f32 %v52, 0.0
    %v54 = vmul.f32 %v53, %v53
    %v55 = vmul.f32 %v51, %v54
    %v56 = vadd.f32 %v50, %v55
    %vm57 = vcmask 7168
    %58 = vst.msk [vmem:[%s3] sm:$0xff] %vm57, %v56
    // Predicated region
    $region18: #{tpu_custom_call.1} parent=1 // pred_check
      _
    $region19: #{tpu_custom_call.1} parent=1 // pred_check_branch
      %60 = sbr.rel (0) target = $region21
    $region20: #{tpu_custom_call.1} parent=1 // pred_region
      _
    $region21: #{tpu_custom_call.1} parent=1 // pred_fallthru
      _
    // Predicated region
    $region22: #{tpu_custom_call.1} parent=1 // pred_check
      _
    $region23: #{tpu_custom_call.1} parent=1 // pred_check_branch
      %62 = sbr.rel (0) target = $region25
    $region24: #{tpu_custom_call.1} parent=1 // pred_region
      _
    $region25: #{tpu_custom_call.1} parent=1 // pred_fallthru
      _
    %63 = vsyncpa [#allocation3], 1

</llo_original>
